<compile_context>
chip_gen: v7x
topology: tpu7x:2x2x1
jax: 0.10.0
libtpu: 0.0.40
codegen_flags: <defaults>
</compile_context>

<pallas_src>
import jax
import jax.numpy as jnp
from jax.experimental import pallas as pl
from jax.experimental.pallas import tpu as pltpu


def _fold_bn_into_conv(w_oihw, bias, gamma, beta, mean, var, eps):
    """Eval-mode BN folded into the conv:  BN(conv(x,w)+b) == conv(x,w') + shift."""
    scale = gamma / jnp.sqrt(var + eps)                      # (Co,)
    w_f = w_oihw * scale[:, None, None, None]                # scale out channels
    shift = (bias - mean) * scale + beta                     # (Co,)
    return w_f, shift


def _banded_weights(w_oihw, W):
    """(Co, Ci, 3, 3) -> (3*W*Ci, W*Co) dy-concatenated banded conv matrix.

    Activation rows are stored channel-minor as (H, W*Ci).  For output row i the
    LHS is [row i-1 | row i | row i+1] (zeros when out of range), so
      band[dy*W*Ci + w_in*Ci + ci, w_out*Co + o]
        = sum_dx [w_in == w_out + dx - 1] * w[o, ci, dy, dx]
    Width borders are handled by the *absence* of rows for w_in outside [0, W).
    """
    Co, Ci, KH, KW = w_oihw.shape
    w_hwio = jnp.transpose(w_oihw, (2, 3, 1, 0))             # (3, 3, Ci, Co)
    bands = []
    for dy in range(KH):
        m = jnp.zeros((W * Ci, W * Co), w_oihw.dtype)
        for dx in range(KW):
            sel = jnp.eye(W, W, k=1 - dx, dtype=w_oihw.dtype)  # (W, W)
            m = m + jnp.kron(sel, w_hwio[dy, dx])
        bands.append(m)
    return jnp.concatenate(bands, axis=0)                    # (3*W*Ci, W*Co)


def _make_kernel(WC):
    K3 = 3 * WC

    def kernel(alpha_ref, x_ref, band_ref, shift_ref, o_ref, h_ref):
        # alpha_ref: SMEM (nsteps,) f32            PReLU slope per block (pad last)
        # x_ref:     VMEM (1, H, WC) f32           input image, channels minor
        #                                          (resident across the block axis)
        # band_ref:  VMEM (1, 2, 3*WC, WC) bf16    this step's 2 banded conv weights
        # shift_ref: VMEM (1, 2, 1, WC)  f32       this step's folded BN/bias shifts
        # o_ref:     VMEM (1, H, WC) f32           output (written on last step only)
        # h_ref:     VMEM (H, WC) f32 scratch      activation carried across blocks
        s = pl.program_id(1)
        last = pl.num_programs(1) - 1

        @pl.when(s == 0)
        def _init():
            h_ref[...] = x_ref[0]

        def conv_bn(h, c):
            # h: (H, WC) f32 -> 3x3 conv + folded-BN shift, f32 result.
            # Build the dy-folded LHS [h shifted down | h | h shifted up]; the
            # row shifts are cheap f32 sublane ops, then ONE f32->bf16 cast.
            zrow = jnp.zeros((1, WC), jnp.float32)
            lhs = jnp.concatenate(
                [jnp.concatenate([zrow, h[:-1]], axis=0),     # row i -> h[i-1]
                 h,                                           # row i -> h[i]
                 jnp.concatenate([h[1:], zrow], axis=0)],     # row i -> h[i+1]
                axis=1).astype(jnp.bfloat16)                  # (H, 3*WC)
            acc = jnp.dot(lhs, band_ref[0, c],                # (3*WC, WC) bf16
                          preferred_element_type=jnp.float32)
            return acc + shift_ref[0, c]                      # (H, WC) + (1, WC)

        @pl.when(s < last)
        def _block():                                         # one residual block
            h = h_ref[...]
            y = conv_bn(h, 0)
            a = alpha_ref[s]
            y = jnp.where(y >= 0.0, y, a * y)                 # PReLU (scalar slope)
            y = conv_bn(y, 1)
            h_ref[...] = h + y                                # block residual

        @pl.when(s == last)
        def _final():                                         # trailing conv + BN
            y = conv_bn(h_ref[...], 0)
            o_ref[0] = (x_ref[0] + y).astype(o_ref.dtype)     # outer residual

    return kernel


def generator_residual_subnet(x_nchw, conv_params, alphas, eps=1e-5):
    """Forward of GeneratorResidualSubnet (BatchNorm in eval mode).

    x_nchw:      (N, C, H, W) float32
    conv_params: list of 2*num_blocks+1 tuples
                 (weight (C,C,3,3), bias (C,), gamma (C,), beta (C,),
                  running_mean (C,), running_var (C,)),
                 ordered [blk0.conv1, blk0.conv2, blk1.conv1, ..., final_conv]
    alphas:      (num_blocks,) PReLU slopes (nn.PReLU() default scalar = 0.25)
    """
    N, C, H, W = x_nchw.shape
    num_convs = len(conv_params)
    num_blocks = (num_convs - 1) // 2
    nsteps = num_blocks + 1
    WC = W * C
    assert WC % 128 == 0, (
        f"W*C={WC} must be a multiple of 128 for the lane-dense layout")

    # Fold BN, build banded weights per conv, then pack them per grid step
    # (2 convs / step; the last step carries the trailing conv + a zero dummy).
    band_per_conv, shift_per_conv = [], []
    for (w, b, g, bt, m, v) in conv_params:
        w_f, sft = _fold_bn_into_conv(w, b, g, bt, m, v, eps)
        band_per_conv.append(_banded_weights(w_f, W))         # (3*WC, WC)
        shift_per_conv.append(jnp.tile(sft, W)[None, :])      # (1, WC), ch. minor

    band_steps, shift_steps = [], []
    for blk in range(num_blocks):
        band_steps.append(jnp.stack([band_per_conv[2 * blk],
                                     band_per_conv[2 * blk + 1]]))
        shift_steps.append(jnp.stack([shift_per_conv[2 * blk],
                                      shift_per_conv[2 * blk + 1]]))
    band_steps.append(jnp.stack([band_per_conv[-1],
                                 jnp.zeros_like(band_per_conv[-1])]))
    shift_steps.append(jnp.stack([shift_per_conv[-1],
                                  jnp.zeros_like(shift_per_conv[-1])]))
    band_all = jnp.stack(band_steps).astype(jnp.bfloat16)     # (nsteps, 2, 3*WC, WC)
    shift_all = jnp.stack(shift_steps).astype(jnp.float32)    # (nsteps, 2, 1, WC)

    alphas_full = jnp.zeros((nsteps,), jnp.float32).at[:num_blocks].set(
        jnp.asarray(alphas, jnp.float32).reshape(num_blocks))

    # NCHW -> (N, H, W*C) with channels minor (the only layout glue outside
    # the kernel; the reshape after the transpose is free).
    x_rows = jnp.transpose(x_nchw, (0, 2, 3, 1)).reshape(N, H, WC)
    x_rows = x_rows.astype(jnp.float32)

    kernel = _make_kernel(WC)
    out_rows = pl.pallas_call(
        kernel,
        out_shape=jax.ShapeDtypeStruct((N, H, WC), jnp.float32),
        grid=(N, nsteps),
        in_specs=[
            # PReLU slopes: tiny scalar table, whole array in SMEM.
            pl.BlockSpec(memory_space=pltpu.MemorySpace.SMEM),
            # Input image: resident across the block axis.
            pl.BlockSpec((1, H, WC), lambda n, s: (n, 0, 0)),
            # Streamed per-block weights / shifts (auto double-buffered).
            pl.BlockSpec((1, 2, 3 * WC, WC), lambda n, s: (s, 0, 0, 0)),
            pl.BlockSpec((1, 2, 1, WC), lambda n, s: (s, 0, 0, 0)),
        ],
        out_specs=pl.BlockSpec((1, H, WC), lambda n, s: (n, 0, 0)),
        scratch_shapes=[pltpu.VMEM((H, WC), jnp.float32)],     # carried activation
        compiler_params=pltpu.CompilerParams(
            dimension_semantics=("parallel", "arbitrary"),
            vmem_limit_bytes=32 * 1024 * 1024,
        ),
    )(alphas_full, x_rows, band_all, shift_all)

    return jnp.transpose(out_rows.reshape(N, H, W, C), (0, 3, 1, 2))


def _reference(x_nchw, conv_params, alphas, eps=1e-5):
    """Pure-JAX f32 reference of the PyTorch forward (eval-mode BN)."""
    def conv_bn(x, p):
        w, b, g, bt, m, v = p
        y = jax.lax.conv_general_dilated(
            x, w, window_strides=(1, 1), padding=((1, 1), (1, 1)),
            dimension_numbers=("NCHW", "OIHW", "NCHW"))
        y = y + b[None, :, None, None]
        inv = (g / jnp.sqrt(v + eps))[None, :, None, None]
        return (y - m[None, :, None, None]) * inv + bt[None, :, None, None]

    num_blocks = (len(conv_params) - 1) // 2
    h = x_nchw
    for i in range(num_blocks):
        res = h
        y = conv_bn(h, conv_params[2 * i])
        y = jnp.where(y >= 0, y, alphas[i] * y)
        y = conv_bn(y, conv_params[2 * i + 1])
        h = res + y
    y = conv_bn(h, conv_params[2 * num_blocks])
    return x_nchw + y


if __name__ == "__main__":
    num_blocks = 2        # small config (module default is 16)
    num_filters = 8       # small config (module default is 64); W*C = 128 lanes
    N, H, W = 2, 16, 16

    key = jax.random.PRNGKey(0)
    key, kx = jax.random.split(key)
    x = jax.random.normal(kx, (N, num_filters, H, W), dtype=jnp.float32)

    conv_params = []
    for _ in range(2 * num_blocks + 1):
        key, kw, kb, kg, kbe, km, kv = jax.random.split(key, 7)
        C = num_filters
        w = 0.1 * jax.random.normal(kw, (C, C, 3, 3), dtype=jnp.float32)
        b = 0.1 * jax.random.normal(kb, (C,), dtype=jnp.float32)
        gamma = 1.0 + 0.1 * jax.random.normal(kg, (C,), dtype=jnp.float32)
        beta = 0.1 * jax.random.normal(kbe, (C,), dtype=jnp.float32)
        mean = 0.1 * jax.random.normal(km, (C,), dtype=jnp.float32)
        var = 1.0 + 0.1 * jnp.abs(jax.random.normal(kv, (C,), dtype=jnp.float32))
        conv_params.append((w, b, gamma, beta, mean, var))
    alphas = jnp.full((num_blocks,), 0.25, dtype=jnp.float32)   # nn.PReLU() init

    fwd = jax.jit(generator_residual_subnet)
    out = jax.block_until_ready(fwd(x, conv_params, alphas))

    ref = _reference(x, conv_params, alphas)
    assert out.shape == x.shape, out.shape
    # bf16 matmul operands with f32 accumulation -> small mixed-precision error.
    max_err = float(jnp.max(jnp.abs(out - ref)))
    assert jnp.allclose(out, ref, atol=5e-2, rtol=5e-2), f"mismatch: {max_err}"
    print("KERNEL_OK")
</pallas_src>

<mosaic_0001>
module attributes {stable_mosaic.version = 11 : i64} {
  func.func @kernel(%arg0: i32, %arg1: i32, %arg2: memref<3xf32, #tpu.memory_space<smem>>, %arg3: memref<1x16x128xf32, #tpu.memory_space<vmem>>, %arg4: memref<1x2x384x128xbf16, #tpu.memory_space<vmem>>, %arg5: memref<1x2x1x128xf32, #tpu.memory_space<vmem>>, %arg6: memref<1x16x128xf32, #tpu.memory_space<vmem>>, %arg7: memref<16x128xf32, #tpu.memory_space<vmem>>) attributes {dimension_semantics = [#tpu.dimension_semantics<parallel>, #tpu.dimension_semantics<arbitrary>], iteration_bounds = array<i64: 2, 3>, scalar_prefetch = 0 : i64, scratch_operands = 1 : i64, tpu.core_type = #tpu.core_type<tc>, window_params = [{transform_indices = @transform_0, window_bounds = array<i64: 3>}, {transform_indices = @transform_1, window_bounds = array<i64: 1, 16, 128>}, {transform_indices = @transform_2, window_bounds = array<i64: 1, 2, 384, 128>}, {transform_indices = @transform_3, window_bounds = array<i64: 1, 2, 1, 128>}, {transform_indices = @transform_4, window_bounds = array<i64: 1, 16, 128>}]} {
    %c0_i32 = arith.constant 0 : i32
    %0 = arith.cmpi eq, %arg1, %c0_i32 : i32
    %1 = arith.extui %0 : i1 to i32
    %c0_i32_0 = arith.constant 0 : i32
    %2 = arith.cmpi ne, %1, %c0_i32_0 : i32
    scf.if %2 {
      %c0 = arith.constant 0 : index
      %c0_4 = arith.constant 0 : index
      %c0_5 = arith.constant 0 : index
      %9 = vector.load %arg3[%c0, %c0_4, %c0_5] : memref<1x16x128xf32, #tpu.memory_space<vmem>>, vector<1x16x128xf32>
      %10 = vector.shape_cast %9 : vector<1x16x128xf32> to vector<16x128xf32>
      %c0_6 = arith.constant 0 : index
      %c0_7 = arith.constant 0 : index
      %11 = vector.load %arg7[%c0_6, %c0_7] : memref<16x128xf32, #tpu.memory_space<vmem>>, vector<16x128xf32>
      tpu.vector_store %arg7[%c0_6, %c0_7], %10 {strides = array<i32>} : memref<16x128xf32, #tpu.memory_space<vmem>>, vector<16x128xf32>,
    } else {
    }
    %c2_i32 = arith.constant 2 : i32
    %3 = arith.cmpi slt, %arg1, %c2_i32 : i32
    %4 = arith.extui %3 : i1 to i32
    %c0_i32_1 = arith.constant 0 : i32
    %5 = arith.cmpi ne, %4, %c0_i32_1 : i32
    scf.if %5 {
      %c0 = arith.constant 0 : index
      %c0_4 = arith.constant 0 : index
      %9 = vector.load %arg7[%c0, %c0_4] : memref<16x128xf32, #tpu.memory_space<vmem>>, vector<16x128xf32>
      %cst = arith.constant 0.000000e+00 : f32
      %10 = vector.broadcast %cst : f32 to vector<1x128xf32>
      %11 = vector.extract_strided_slice %9 {offsets = [0, 0], sizes = [15, 128], strides = [1, 1]} : vector<16x128xf32> to vector<15x128xf32>
      %12 = tpu.concatenate %10, %11 in 0 : vector<1x128xf32>, vector<15x128xf32> -> vector<16x128xf32>
      %13 = vector.extract_strided_slice %9 {offsets = [1, 0], sizes = [15, 128], strides = [1, 1]} : vector<16x128xf32> to vector<15x128xf32>
      %14 = tpu.concatenate %13, %10 in 0 : vector<15x128xf32>, vector<1x128xf32> -> vector<16x128xf32>
      %15 = tpu.concatenate %12, %9, %14 in 1 : vector<16x128xf32>, vector<16x128xf32>, vector<16x128xf32> -> vector<16x384xf32>
      %16 = arith.truncf %15 : vector<16x384xf32> to vector<16x384xbf16>
      %c0_5 = arith.constant 0 : index
      %c0_6 = arith.constant 0 : index
      %c0_7 = arith.constant 0 : index
      %c0_8 = arith.constant 0 : index
      %17 = vector.load %arg4[%c0_5, %c0_6, %c0_7, %c0_8] : memref<1x2x384x128xbf16, #tpu.memory_space<vmem>>, vector<1x1x384x128xbf16>
      %18 = vector.shape_cast %17 : vector<1x1x384x128xbf16> to vector<384x128xbf16>
      %cst_9 = arith.constant dense<0.000000e+00> : vector<16x128xf32>
      %19 = tpu.matmul %16, %18, %cst_9 {dimension_numbers = #tpu.dot_dimension_numbers<[1], [0], [0], [1], [0, 0, 1, 1], [], []>} : vector<16x384xbf16>, vector<384x128xbf16>, vector<16x128xf32> -> vector<16x128xf32>
      %c0_10 = arith.constant 0 : index
      %c0_11 = arith.constant 0 : index
      %c0_12 = arith.constant 0 : index
      %c0_13 = arith.constant 0 : index
      %20 = vector.load %arg5[%c0_10, %c0_11, %c0_12, %c0_13] : memref<1x2x1x128xf32, #tpu.memory_space<vmem>>, vector<1x1x1x128xf32>
      %21 = vector.shape_cast %20 : vector<1x1x1x128xf32> to vector<1x128xf32>
      %22 = vector.broadcast %21 : vector<1x128xf32> to vector<16x128xf32>
      %23 = arith.addf %19, %22 : vector<16x128xf32>
      %24 = arith.index_cast %arg1 : i32 to index
      %25 = memref.load %arg2[%24] : memref<3xf32, #tpu.memory_space<smem>>
      %cst_14 = arith.constant 0.000000e+00 : f32
      %26 = vector.broadcast %cst_14 : f32 to vector<16x128xf32>
      %27 = arith.cmpf oge, %23, %26 : vector<16x128xf32>
      %28 = vector.broadcast %25 : f32 to vector<16x128xf32>
      %29 = arith.mulf %28, %23 : vector<16x128xf32>
      %30 = arith.select %27, %23, %29 : vector<16x128xi1>, vector<16x128xf32>
      %cst_15 = arith.constant 0.000000e+00 : f32
      %31 = vector.broadcast %cst_15 : f32 to vector<1x128xf32>
      %32 = vector.extract_strided_slice %30 {offsets = [0, 0], sizes = [15, 128], strides = [1, 1]} : vector<16x128xf32> to vector<15x128xf32>
      %33 = tpu.concatenate %31, %32 in 0 : vector<1x128xf32>, vector<15x128xf32> -> vector<16x128xf32>
      %34 = vector.extract_strided_slice %30 {offsets = [1, 0], sizes = [15, 128], strides = [1, 1]} : vector<16x128xf32> to vector<15x128xf32>
      %35 = tpu.concatenate %34, %31 in 0 : vector<15x128xf32>, vector<1x128xf32> -> vector<16x128xf32>
      %36 = tpu.concatenate %33, %30, %35 in 1 : vector<16x128xf32>, vector<16x128xf32>, vector<16x128xf32> -> vector<16x384xf32>
      %37 = arith.truncf %36 : vector<16x384xf32> to vector<16x384xbf16>
      %c0_16 = arith.constant 0 : index
      %c1 = arith.constant 1 : index
      %c0_17 = arith.constant 0 : index
      %c0_18 = arith.constant 0 : index
      %38 = vector.load %arg4[%c0_16, %c1, %c0_17, %c0_18] : memref<1x2x384x128xbf16, #tpu.memory_space<vmem>>, vector<1x1x384x128xbf16>
      %39 = vector.shape_cast %38 : vector<1x1x384x128xbf16> to vector<384x128xbf16>
      %cst_19 = arith.constant dense<0.000000e+00> : vector<16x128xf32>
      %40 = tpu.matmul %37, %39, %cst_19 {dimension_numbers = #tpu.dot_dimension_numbers<[1], [0], [0], [1], [0, 0, 1, 1], [], []>} : vector<16x384xbf16>, vector<384x128xbf16>, vector<16x128xf32> -> vector<16x128xf32>
      %c0_20 = arith.constant 0 : index
      %c1_21 = arith.constant 1 : index
      %c0_22 = arith.constant 0 : index
      %c0_23 = arith.constant 0 : index
      %41 = vector.load %arg5[%c0_20, %c1_21, %c0_22, %c0_23] : memref<1x2x1x128xf32, #tpu.memory_space<vmem>>, vector<1x1x1x128xf32>
      %42 = vector.shape_cast %41 : vector<1x1x1x128xf32> to vector<1x128xf32>
      %43 = vector.broadcast %42 : vector<1x128xf32> to vector<16x128xf32>
      %44 = arith.addf %40, %43 : vector<16x128xf32>
      %45 = arith.addf %9, %44 : vector<16x128xf32>
      %c0_24 = arith.constant 0 : index
      %c0_25 = arith.constant 0 : index
      %46 = vector.load %arg7[%c0_24, %c0_25] : memref<16x128xf32, #tpu.memory_space<vmem>>, vector<16x128xf32>
      tpu.vector_store %arg7[%c0_24, %c0_25], %45 {strides = array<i32>} : memref<16x128xf32, #tpu.memory_space<vmem>>, vector<16x128xf32>,
    } else {
    }
    %c2_i32_2 = arith.constant 2 : i32
    %6 = arith.cmpi eq, %arg1, %c2_i32_2 : i32
    %7 = arith.extui %6 : i1 to i32
    %c0_i32_3 = arith.constant 0 : i32
    %8 = arith.cmpi ne, %7, %c0_i32_3 : i32
    scf.if %8 {
      %c0 = arith.constant 0 : index
      %c0_4 = arith.constant 0 : index
      %9 = vector.load %arg7[%c0, %c0_4] : memref<16x128xf32, #tpu.memory_space<vmem>>, vector<16x128xf32>
      %cst = arith.constant 0.000000e+00 : f32
      %10 = vector.broadcast %cst : f32 to vector<1x128xf32>
      %11 = vector.extract_strided_slice %9 {offsets = [0, 0], sizes = [15, 128], strides = [1, 1]} : vector<16x128xf32> to vector<15x128xf32>
      %12 = tpu.concatenate %10, %11 in 0 : vector<1x128xf32>, vector<15x128xf32> -> vector<16x128xf32>
      %13 = vector.extract_strided_slice %9 {offsets = [1, 0], sizes = [15, 128], strides = [1, 1]} : vector<16x128xf32> to vector<15x128xf32>
      %14 = tpu.concatenate %13, %10 in 0 : vector<15x128xf32>, vector<1x128xf32> -> vector<16x128xf32>
      %15 = tpu.concatenate %12, %9, %14 in 1 : vector<16x128xf32>, vector<16x128xf32>, vector<16x128xf32> -> vector<16x384xf32>
      %16 = arith.truncf %15 : vector<16x384xf32> to vector<16x384xbf16>
      %c0_5 = arith.constant 0 : index
      %c0_6 = arith.constant 0 : index
      %c0_7 = arith.constant 0 : index
      %c0_8 = arith.constant 0 : index
      %17 = vector.load %arg4[%c0_5, %c0_6, %c0_7, %c0_8] : memref<1x2x384x128xbf16, #tpu.memory_space<vmem>>, vector<1x1x384x128xbf16>
      %18 = vector.shape_cast %17 : vector<1x1x384x128xbf16> to vector<384x128xbf16>
      %cst_9 = arith.constant dense<0.000000e+00> : vector<16x128xf32>
      %19 = tpu.matmul %16, %18, %cst_9 {dimension_numbers = #tpu.dot_dimension_numbers<[1], [0], [0], [1], [0, 0, 1, 1], [], []>} : vector<16x384xbf16>, vector<384x128xbf16>, vector<16x128xf32> -> vector<16x128xf32>
      %c0_10 = arith.constant 0 : index
      %c0_11 = arith.constant 0 : index
      %c0_12 = arith.constant 0 : index
      %c0_13 = arith.constant 0 : index
      %20 = vector.load %arg5[%c0_10, %c0_11, %c0_12, %c0_13] : memref<1x2x1x128xf32, #tpu.memory_space<vmem>>, vector<1x1x1x128xf32>
      %21 = vector.shape_cast %20 : vector<1x1x1x128xf32> to vector<1x128xf32>
      %22 = vector.broadcast %21 : vector<1x128xf32> to vector<16x128xf32>
      %23 = arith.addf %19, %22 : vector<16x128xf32>
      %c0_14 = arith.constant 0 : index
      %c0_15 = arith.constant 0 : index
      %c0_16 = arith.constant 0 : index
      %24 = vector.load %arg3[%c0_14, %c0_15, %c0_16] : memref<1x16x128xf32, #tpu.memory_space<vmem>>, vector<1x16x128xf32>
      %25 = vector.shape_cast %24 : vector<1x16x128xf32> to vector<16x128xf32>
      %26 = arith.addf %25, %23 : vector<16x128xf32>
      %c0_17 = arith.constant 0 : index
      %c0_18 = arith.constant 0 : index
      %c0_19 = arith.constant 0 : index
      %27 = vector.load %arg6[%c0_17, %c0_18, %c0_19] : memref<1x16x128xf32, #tpu.memory_space<vmem>>, vector<1x16x128xf32>
      %28 = vector.shape_cast %27 : vector<1x16x128xf32> to vector<16x128xf32>
      %29 = vector.shape_cast %26 : vector<16x128xf32> to vector<1x16x128xf32>
      tpu.vector_store %arg6[%c0_17, %c0_18, %c0_19], %29 {strides = array<i32>} : memref<1x16x128xf32, #tpu.memory_space<vmem>>, vector<1x16x128xf32>,
    } else {
    }
    return
  }
  func.func @transform_0(%arg0: i32, %arg1: i32) -> i32 {
    %c0_i32 = arith.constant 0 : i32
    %c0_i32_0 = arith.constant 0 : i32
    return %c0_i32 : i32
  }
  func.func @transform_1(%arg0: i32, %arg1: i32) -> (i32, i32, i32) {
    %c0_i32 = arith.constant 0 : i32
    %c0_i32_0 = arith.constant 0 : i32
    %c0_i32_1 = arith.constant 0 : i32
    return %arg0, %c0_i32, %c0_i32_0 : i32, i32, i32
  }
  func.func @transform_2(%arg0: i32, %arg1: i32) -> (i32, i32, i32, i32) {
    %c0_i32 = arith.constant 0 : i32
    %c0_i32_0 = arith.constant 0 : i32
    %c0_i32_1 = arith.constant 0 : i32
    %c0_i32_2 = arith.constant 0 : i32
    return %arg1, %c0_i32, %c0_i32_0, %c0_i32_1 : i32, i32, i32, i32
  }
  func.func @transform_3(%arg0: i32, %arg1: i32) -> (i32, i32, i32, i32) {
    %c0_i32 = arith.constant 0 : i32
    %c0_i32_0 = arith.constant 0 : i32
    %c0_i32_1 = arith.constant 0 : i32
    %c0_i32_2 = arith.constant 0 : i32
    return %arg1, %c0_i32, %c0_i32_0, %c0_i32_1 : i32, i32, i32, i32
  }
  func.func @transform_4(%arg0: i32, %arg1: i32) -> (i32, i32, i32) {
    %c0_i32 = arith.constant 0 : i32
    %c0_i32_0 = arith.constant 0 : i32
    %c0_i32_1 = arith.constant 0 : i32
    return %arg0, %c0_i32, %c0_i32_0 : i32, i32, i32
  }
}

</mosaic_0001>

<llo_original>
// kernel: tile.44
$region0: #{tile.44}
  #allocation0 [shape = 's32[1]{0}', space=sflag, size = 0x4, scoped, tag = 'scoped memory for tile.44']
  %s0 = inlined_call_operand.vmem [shape: f32[8], index: 0, kind: input, shape index: {}]
  %s1 = inlined_call_operand.vmem [shape: f32[16,8], index: 1, kind: output, shape index: {}]
  // Predicated region
  $region2: #{tile.44} parent=0 // pred_check
    _
  $region3: #{tile.44} parent=0 // pred_check_branch
    %3 = sbr.rel (0) target = $region5
  $region4: #{tile.44} parent=0 // pred_region
    _
  $region5: #{tile.44} parent=0 // pred_fallthru
    _
  %v4 = vld [vmem:[%s0] ss:$0 sm:$0xff]
  %5 = vst [vmem:[%s1] sm:$0xff] %v4
  %s6 = scalar_lea.vmem %s1, 8
  %7 = vst [vmem:[%s6] sm:$0xff] %v4

// kernel: tile.49
$region0: #{tile.49}
  %s0 = inlined_call_operand.vmem [shape: f32[16,8], index: 0, kind: input, shape index: {}]
  %s1 = inlined_call_operand.vmem [shape: f32[1,1,128], index: 1, kind: output, shape index: {}]
  $region1: #{tile.49} parent=0
    #allocation0 [shape = 'u8[4096]{0}', space=vmem, size = 0x1000, scoped, tag = 'scoped mem for output reshape']
    %v2 = vld [vmem:[%s0] sm:$0x1]
    %vm3 = vcmask 64512
    %4 = vst.msk [vmem:[#allocation0] sm:$0x1] %vm3, %v2
    %s5 = scalar_lea.vmem %s0, 15
    %v6 = vld [vmem:[%s5] sm:$0x1]
    %7 = vrot.lane.b32.xlu0 %v6, 120
    %v8 = vpop.permute.xlu0 %7
    %vm9 = vcmask 1048512
    %10 = vst.msk [vmem:[#allocation0] sm:$0x1] %vm9, %v8
    %s11 = scalar_lea.vmem %s0, 14
    %v12 = vld [vmem:[%s11] sm:$0x1]
    %13 = vrot.lane.b32.xlu0 %v12, 112
    %v14 = vpop.permute.xlu0 %13
    %vm15 = vcmask 982912
    %16 = vst.msk [vmem:[#allocation0] sm:$0x1] %vm15, %v14
    %s17 = scalar_lea.vmem %s0, 13
    %v18 = vld [vmem:[%s17] sm:$0x1]
    %19 = vrot.lane.b32.xlu0 %v18, 104
    %v20 = vpop.permute.xlu0 %19
    %vm21 = vcmask 917312
    %22 = vst.msk [vmem:[#allocation0] sm:$0x1] %vm21, %v20
    %s23 = scalar_lea.vmem %s0, 12
    %v24 = vld [vmem:[%s23] sm:$0x1]
    %25 = vrot.lane.b32.xlu0 %v24, 96
    %v26 = vpop.permute.xlu0 %25
    %vm27 = vcmask 851712
    %28 = vst.msk [vmem:[#allocation0] sm:$0x1] %vm27, %v26
    %s29 = scalar_lea.vmem %s0, 11
    %v30 = vld [vmem:[%s29] sm:$0x1]
    %31 = vrot.lane.b32.xlu0 %v30, 88
    %v32 = vpop.permute.xlu0 %31
    %vm33 = vcmask 786112
    %34 = vst.msk [vmem:[#allocation0] sm:$0x1] %vm33, %v32
    %s35 = scalar_lea.vmem %s0, 10
    %v36 = vld [vmem:[%s35] sm:$0x1]
    %37 = vrot.lane.b32.xlu0 %v36, 80
    %v38 = vpop.permute.xlu0 %37
    %vm39 = vcmask 720512
    %40 = vst.msk [vmem:[#allocation0] sm:$0x1] %vm39, %v38
    %s41 = scalar_lea.vmem %s0, 9
    %v42 = vld [vmem:[%s41] sm:$0x1]
    %43 = vrot.lane.b32.xlu0 %v42, 72
    %v44 = vpop.permute.xlu0 %43
    %vm45 = vcmask 654912
    %46 = vst.msk [vmem:[#allocation0] sm:$0x1] %vm45, %v44
    %s47 = scalar_lea.vmem %s0, 8
    %v48 = vld [vmem:[%s47] sm:$0x1]
    %49 = vrot.lane.b32.xlu0 %v48, 64
    %v50 = vpop.permute.xlu0 %49
    %vm51 = vcmask 589312
    %52 = vst.msk [vmem:[#allocation0] sm:$0x1] %vm51, %v50
    %s53 = scalar_lea.vmem %s0, 7
    %v54 = vld [vmem:[%s53] sm:$0x1]
    %55 = vrot.lane.b32.xlu0 %v54, 56
    %v56 = vpop.permute.xlu0 %55
    %vm57 = vcmask 523712
    %58 = vst.msk [vmem:[#allocation0] sm:$0x1] %vm57, %v56
    %s59 = scalar_lea.vmem %s0, 6
    %v60 = vld [vmem:[%s59] sm:$0x1]
    %61 = vrot.lane.b32.xlu0 %v60, 48
    %v62 = vpop.permute.xlu0 %61
    %vm63 = vcmask 458112
    %64 = vst.msk [vmem:[#allocation0] sm:$0x1] %vm63, %v62
    %s65 = scalar_lea.vmem %s0, 5
    %v66 = vld [vmem:[%s65] sm:$0x1]
    %67 = vrot.lane.b32.xlu0 %v66, 40
    %v68 = vpop.permute.xlu0 %67
    %vm69 = vcmask 392512
    %70 = vst.msk [vmem:[#allocation0] sm:$0x1] %vm69, %v68
    %s71 = scalar_lea.vmem %s0, 4
    %v72 = vld [vmem:[%s71] sm:$0x1]
    %73 = vrot.lane.b32.xlu0 %v72, 32
    %v74 = vpop.permute.xlu0 %73
    %vm75 = vcmask 326912
    %76 = vst.msk [vmem:[#allocation0] sm:$0x1] %vm75, %v74
    %s77 = scalar_lea.vmem %s0, 3
    %v78 = vld [vmem:[%s77] sm:$0x1]
    %79 = vrot.lane.b32.xlu0 %v78, 24
    %v80 = vpop.permute.xlu0 %79
    %vm81 = vcmask 261312
    %82 = vst.msk [vmem:[#allocation0] sm:$0x1] %vm81, %v80
    %s83 = scalar_lea.vmem %s0, 2
    %v84 = vld [vmem:[%s83] sm:$0x1]
    %85 = vrot.lane.b32.xlu0 %v84, 16
    %v86 = vpop.permute.xlu0 %85
    %vm87 = vcmask 195712
    %88 = vst.msk [vmem:[#allocation0] sm:$0x1] %vm87, %v86
    %s89 = scalar_lea.vmem %s0, 1
    %v90 = vld [vmem:[%s89] sm:$0x1]
    %91 = vrot.lane.b32.xlu0 %v90, 8
    %v92 = vpop.permute.xlu0 %91
    %vm93 = vcmask 130112
    %94 = vst.msk [vmem:[#allocation0] sm:$0x1] %vm93, %v92
    %s96 = sshllo.u32 0, 1
    %v98 = vld [vmem:[#allocation0] sm:%s96]
    %s99 = sshllo.u32 0, 1
    %100 = vst [vmem:[%s1] sm:%s99] %v98

// kernel: generator_residual_subnet.1
$region0: #{generator_residual_subnet.1}
  #allocation0 [shape = 'u32[]', space=smem, size = 0x4, offset = 0x4, fixed_abs, tag = 'smem constant byte address 0x4 - core index']
  #allocation1 [shape = 'u32[144,128]{1,0:T(1,128)}', space=vmem, size = 0x12000, scoped, tag = 'internal scratch']
  #allocation2 [shape = 'f32[16,128]{1,0:T(8,128)}', space=vmem, size = 0x2000, scoped, tag = 'scratch operand']
  %s0 = inlined_call_operand.vmem [shape: f32[3], index: 0, kind: input, shape index: {}]
  %s1 = inlined_call_operand.vmem [shape: f32[2,16,128], index: 1, kind: input, shape index: {}]
  %s2 = inlined_call_operand.vmem [shape: bf16[3,2,384,128], index: 2, kind: input, shape index: {}]
  %s3 = inlined_call_operand.vmem [shape: f32[3,2,1,128], index: 3, kind: input, shape index: {}]
  %s4 = inlined_call_operand.vmem [shape: f32[2,16,128], index: 4, kind: output, shape index: {}]
  %s5 = sld [smem:[#allocation0]]
  $region65: #{generator_residual_subnet.1} parent=0
    _
  %s7 = ssub.s32 1, %s5
  %s8 = scalar_select 0, %s7, %s5
  $region1: #{generator_residual_subnet.1} parent=0
    #allocation3 [shape = 'u8[512]{0}', space=smem, size = 0x200, scoped, tag = 'input window, operand 0, single buffered']
    #allocation4 [shape = 's32[2]{0}', space=sflag, size = 0x8, scoped, tag = 'scoped memory for generator_residual_subnet.1']
    %9 = vsyncpa [#allocation4], 0
    loop: start=0, step=1, limit=8
    $region2: #{generator_residual_subnet.1} parent=1 // loop_pre_header
      _
    $region3: #{generator_residual_subnet.1} parent=1 // loop_header
      %s11 = sphi 0, %s15
      %p12 = scmp.ge.s32.totalorder %s11, 8
      %s18 = sphi 0, %s30
      %s19 = sphi 0, %s26
      %s20 = sphi 0, %s18
      %s21 = sphi 0, %s19
      %s22 = sphi 0, %s20
      %s23 = sphi 0, %s21
      %s31 = sphi 0, %s31
      %s33 = sphi 0, %s31
      %s34 = sphi 0, %s33
      %s48 = sphi 0, %s34
      %s54 = sphi 0, %s56
      %s57 = sphi 0, %s54
      %s58 = sphi 0, %s57
      %s74 = sphi 0, %s58
      %s80 = sphi 0, %s82
      %s83 = sphi 0, %s80
      %s84 = sphi 0, %s83
      %s100 = sphi 0, %s84
      %s106 = sphi 0, %s108
      %s109 = sphi 0, %s106
      %s110 = sphi 0, %s109
      %s126 = sphi 0, %s110
      %s132 = sphi 0, %s134
      %s135 = sphi 0, %s132
      %s136 = sphi 0, %s135
      %s152 = sphi 0, %s136
    $region4: #{generator_residual_subnet.1} parent=1 // loop_header_branch
      %14 = sbr.rel (%p12) target = $region8
    $region5: #{generator_residual_subnet.1} parent=1 // loop_body
      %s16 = ssub.s32 %s11, 1
      %s17 = ssub.s32 %s11, 2
      %s24 = sadd.s32 1, %s19
      %p25 = scmp.ge.s32.totalorder %s24, 3
      %s26 = scalar_select %p25, 0, %s24
      %s27 = sadd.s32 1, %s18
      %s28 = scalar_select %p25, %s27, %s18
      %p29 = scmp.ge.s32.totalorder %s28, 2
      %s30 = scalar_select %p29, 0, %s28
      %s32 = sadd.s32 %s31, 1
      %p35 = scmp.eq.s32.totalorder %s11, 5
      %p36 = scmp.ne.s32.totalorder %s31, %s33
      %p37 = scmp.eq.s32.totalorder %s11, 0
      %p38 = por %p36, %p37
      %p39 = scmp.ne.s32.totalorder %s31, %s33
      %p40 = scmp.eq.s32.totalorder %s16, 5
      %p41 = por %p39, %p40
      %p42 = scmp.ne.s32.totalorder %s33, %s34
      %p43 = scmp.eq.s32.totalorder %s16, 0
      %p44 = por %p42, %p43
      %p45 = scmp.ne.s32.totalorder %s33, %s34
      %p46 = scmp.eq.s32.totalorder %s17, 5
      %p47 = por %p45, %p46
      %p49 = scmp.ne.s32.totalorder %s34, %s48
      %p50 = scmp.eq.s32.totalorder %s17, 0
      %p51 = por %p49, %p50
      %s52 = ssub.s32 %s18, %s30
      %p53 = scmp.eq.s32.totalorder %s52, 0
      %s55 = sadd.s32 %s54, 1
      %s56 = scalar_select %p53, %s54, %s55
      %p59 = pneg %p53
      %p60 = scmp.eq.s32.totalorder %s11, 5
      %p61 = por %p59, %p60
      %p62 = scmp.ne.s32.totalorder %s54, %s57
      %p63 = scmp.eq.s32.totalorder %s11, 0
      %p64 = por %p62, %p63
      %p65 = scmp.ne.s32.totalorder %s54, %s57
      %p66 = scmp.eq.s32.totalorder %s16, 5
      %p67 = por %p65, %p66
      %p68 = scmp.ne.s32.totalorder %s57, %s58
      %p69 = scmp.eq.s32.totalorder %s16, 0
      %p70 = por %p68, %p69
      %p71 = scmp.ne.s32.totalorder %s57, %s58
      %p72 = scmp.eq.s32.totalorder %s17, 5
      %p73 = por %p71, %p72
      %p75 = scmp.ne.s32.totalorder %s58, %s74
      %p76 = scmp.eq.s32.totalorder %s17, 0
      %p77 = por %p75, %p76
      %s78 = ssub.s32 %s19, %s26
      %p79 = scmp.eq.s32.totalorder %s78, 0
      %s81 = sadd.s32 %s80, 1
      %s82 = scalar_select %p79, %s80, %s81
      %p85 = pneg %p79
      %p86 = scmp.eq.s32.totalorder %s11, 5
      %p87 = por %p85, %p86
      %p88 = scmp.ne.s32.totalorder %s80, %s83
      %p89 = scmp.eq.s32.totalorder %s11, 0
      %p90 = por %p88, %p89
      %p91 = scmp.ne.s32.totalorder %s80, %s83
      %p92 = scmp.eq.s32.totalorder %s16, 5
      %p93 = por %p91, %p92
      %p94 = scmp.ne.s32.totalorder %s83, %s84
      %p95 = scmp.eq.s32.totalorder %s16, 0
      %p96 = por %p94, %p95
      %p97 = scmp.ne.s32.totalorder %s83, %s84
      %p98 = scmp.eq.s32.totalorder %s17, 5
      %p99 = por %p97, %p98
      %p101 = scmp.ne.s32.totalorder %s84, %s100
      %p102 = scmp.eq.s32.totalorder %s17, 0
      %p103 = por %p101, %p102
      %s104 = ssub.s32 %s19, %s26
      %p105 = scmp.eq.s32.totalorder %s104, 0
      %s107 = sadd.s32 %s106, 1
      %s108 = scalar_select %p105, %s106, %s107
      %p111 = pneg %p105
      %p112 = scmp.eq.s32.totalorder %s11, 5
      %p113 = por %p111, %p112
      %p114 = scmp.ne.s32.totalorder %s106, %s109
      %p115 = scmp.eq.s32.totalorder %s11, 0
      %p116 = por %p114, %p115
      %p117 = scmp.ne.s32.totalorder %s106, %s109
      %p118 = scmp.eq.s32.totalorder %s16, 5
      %p119 = por %p117, %p118
      %p120 = scmp.ne.s32.totalorder %s109, %s110
      %p121 = scmp.eq.s32.totalorder %s16, 0
      %p122 = por %p120, %p121
      %p123 = scmp.ne.s32.totalorder %s109, %s110
      %p124 = scmp.eq.s32.totalorder %s17, 5
      %p125 = por %p123, %p124
      %p127 = scmp.ne.s32.totalorder %s110, %s126
      %p128 = scmp.eq.s32.totalorder %s17, 0
      %p129 = por %p127, %p128
      %s130 = ssub.s32 %s18, %s30
      %p131 = scmp.eq.s32.totalorder %s130, 0
      %s133 = sadd.s32 %s132, 1
      %s134 = scalar_select %p131, %s132, %s133
      %p137 = pneg %p131
      %p138 = scmp.eq.s32.totalorder %s11, 5
      %p139 = por %p137, %p138
      %p140 = scmp.ne.s32.totalorder %s132, %s135
      %p141 = scmp.eq.s32.totalorder %s11, 0
      %p142 = por %p140, %p141
      %p143 = scmp.ne.s32.totalorder %s132, %s135
      %p144 = scmp.eq.s32.totalorder %s16, 5
      %p145 = por %p143, %p144
      %p146 = scmp.ne.s32.totalorder %s135, %s136
      %p147 = scmp.eq.s32.totalorder %s16, 0
      %p148 = por %p146, %p147
      %p149 = scmp.ne.s32.totalorder %s135, %s136
      %p150 = scmp.eq.s32.totalorder %s17, 5
      %p151 = por %p149, %p150
      %p153 = scmp.ne.s32.totalorder %s136, %s152
      %p154 = scmp.eq.s32.totalorder %s17, 0
      %p155 = por %p153, %p154
      %p156 = scmp.le.s32.totalorder 1, %s11
      %p157 = scmp.lt.s32.totalorder %s11, 7
      %p158 = pnand %p156, %p157
      %p159 = pneg %p158
      // Predicated region
      $region9: #{generator_residual_subnet.1} parent=5 // pred_check
        _
      $region10: #{generator_residual_subnet.1} parent=5 // pred_check_branch
        %161 = sbr.rel (%p158) target = $region12
      $region11: #{generator_residual_subnet.1} parent=5 // pred_region
        %s162 = ssub.s32 %s11, 1
        // Predicated region
        $region13: #{generator_residual_subnet.1} parent=11 // pred_check
          %p163 = pneg %p44
        $region14: #{generator_residual_subnet.1} parent=11 // pred_check_branch
          %165 = sbr.rel (%p163) target = $region16
        $region15: #{generator_residual_subnet.1} parent=11 // pred_region
          %s167 = ssub.s32 16, 16
          %168 = vsyncadd [#allocation4], %s167
          %s170 = sshll.u32 %s0, 4
          %s171 = int_to_ptr.vmem [resolvable:$true] %s170
          %173 = dma.vmem_to_smem %s171, 16, [#allocation3], [#allocation4]
        $region16: #{generator_residual_subnet.1} parent=11 // pred_fallthru
          _
      $region12: #{generator_residual_subnet.1} parent=5 // pred_fallthru
        _
      %p174 = scmp.lt.s32.totalorder %s11, 6
      // Predicated region
      $region17: #{generator_residual_subnet.1} parent=5 // pred_check
        %p175 = pneg %p174
      $region18: #{generator_residual_subnet.1} parent=5 // pred_check_branch
        %177 = sbr.rel (%p175) target = $region20
      $region19: #{generator_residual_subnet.1} parent=5 // pred_region
        // Predicated region
        $region21: #{generator_residual_subnet.1} parent=19 // pred_check
          %p178 = pneg %p64
        $region22: #{generator_residual_subnet.1} parent=19 // pred_check_branch
          %180 = sbr.rel (%p178) target = $region24
        $region23: #{generator_residual_subnet.1} parent=19 // pred_region
          %p181 = scmp.lt.s32.totalorder %s18, 1
          %s182 = scalar_select %p181, %s18, 1
          %s183 = smul.addr %s182, 2
          %s184 = smul.addr %s183, 8
          %s185 = scalar_lea.vmem %s1, %s184
        $region24: #{generator_residual_subnet.1} parent=19 // pred_fallthru
          _
        // Predicated region
        $region25: #{generator_residual_subnet.1} parent=19 // pred_check
          %p186 = pneg %p90
        $region26: #{generator_residual_subnet.1} parent=19 // pred_check_branch
          %188 = sbr.rel (%p186) target = $region28
        $region27: #{generator_residual_subnet.1} parent=19 // pred_region
          %p189 = scmp.lt.s32.totalorder %s19, 2
          %s190 = scalar_select %p189, %s19, 2
          %s191 = smul.addr %s190, 96
          %s192 = smul.addr %s191, 4
          %s193 = scalar_lea.vmem %s2, %s192
        $region28: #{generator_residual_subnet.1} parent=19 // pred_fallthru
          _
        // Predicated region
        $region29: #{generator_residual_subnet.1} parent=19 // pred_check
          %p194 = pneg %p116
        $region30: #{generator_residual_subnet.1} parent=19 // pred_check_branch
          %196 = sbr.rel (%p194) target = $region32
        $region31: #{generator_residual_subnet.1} parent=19 // pred_region
          %p197 = scmp.lt.s32.totalorder %s19, 2
          %s198 = scalar_select %p197, %s19, 2
          %s199 = smul.addr %s198, 2
          %s200 = scalar_lea.vmem %s3, %s199
        $region32: #{generator_residual_subnet.1} parent=19 // pred_fallthru
          _
      $region20: #{generator_residual_subnet.1} parent=5 // pred_fallthru
        _
      %p201 = scmp.le.s32.totalorder 1, %s11
      %p202 = scmp.lt.s32.totalorder %s11, 7
      %p203 = pnand %p201, %p202
      %p204 = pneg %p203
      // Predicated region
      $region33: #{generator_residual_subnet.1} parent=5 // pred_check
        _
      $region34: #{generator_residual_subnet.1} parent=5 // pred_check_branch
        %206 = sbr.rel (%p203) target = $region36
      $region35: #{generator_residual_subnet.1} parent=5 // pred_region
        %s207 = ssub.s32 %s11, 1
        // Predicated region
        $region37: #{generator_residual_subnet.1} parent=35 // pred_check
          %p208 = pneg %p44
        $region38: #{generator_residual_subnet.1} parent=35 // pred_check_branch
          %210 = sbr.rel (%p208) target = $region40
        $region39: #{generator_residual_subnet.1} parent=35 // pred_region
          %211 = dma.done [#allocation4], 16
        $region40: #{generator_residual_subnet.1} parent=35 // pred_fallthru
          _
        %212 = sfence
        %p213 = pneg %p44
        %p214 = pneg %p41
        %p215 = scmp.lt.s32.totalorder %s20, 1
        %s216 = scalar_select %p215, %s20, 1
        %s217 = smul.addr %s216, 2
        %s218 = smul.addr %s217, 8
        %s219 = scalar_lea.vmem %s1, %s218
        %p220 = pneg %p70
        %p221 = pneg %p67
        %p222 = scmp.lt.s32.totalorder %s21, 2
        %s223 = scalar_select %p222, %s21, 2
        %s224 = smul.addr %s223, 96
        %s225 = smul.addr %s224, 4
        %s226 = scalar_lea.vmem %s2, %s225
        %p227 = pneg %p96
        %p228 = pneg %p93
        %p229 = scmp.lt.s32.totalorder %s21, 2
        %s230 = scalar_select %p229, %s21, 2
        %s231 = smul.addr %s230, 2
        %s232 = scalar_lea.vmem %s3, %s231
        %p233 = pneg %p122
        %p234 = pneg %p119
        %p235 = pneg %p148
        %p236 = pneg %p145
        %p237 = scmp.lt.s32.totalorder %s20, 1
        %s238 = scalar_select %p237, %s20, 1
        %s239 = smul.addr %s238, 2
        %s240 = smul.addr %s239, 8
        %s241 = scalar_lea.vmem %s4, %s240
        %p242 = scmp.lt.s32.totalorder %s20, 1
        %s243 = scalar_select %p242, %s20, 1
        %s244 = smul.addr %s243, 2
        %s245 = smul.addr %s244, 8
        %s246 = scalar_lea.vmem %s1, %s245
        %p247 = scmp.lt.s32.totalorder %s21, 2
        %s248 = scalar_select %p247, %s21, 2
        %s249 = smul.addr %s248, 96
        %s250 = smul.addr %s249, 4
        %s251 = scalar_lea.vmem %s2, %s250
        %p252 = scmp.lt.s32.totalorder %s21, 2
        %s253 = scalar_select %p252, %s21, 2
        %s254 = smul.addr %s253, 2
        %s255 = scalar_lea.vmem %s3, %s254
        %p256 = scmp.lt.s32.totalorder %s20, 1
        %s257 = scalar_select %p256, %s20, 1
        %s258 = smul.addr %s257, 2
        %s259 = smul.addr %s258, 8
        %s260 = scalar_lea.vmem %s4, %s259
        %p262 = scmp.eq.s32.totalorder %s21, 0
        // Predicated region
        $region41: #{generator_residual_subnet.1} parent=35 // pred_check
          %p263 = pneg %p262
        $region42: #{generator_residual_subnet.1} parent=35 // pred_check_branch
          %265 = sbr.rel (%p263) target = $region44
        $region43: #{generator_residual_subnet.1} parent=35 // pred_region
          %v266 = vld [vmem:[%s246] sm:$0xff]
          %v267 = vld [vmem:[%s246 + $0x8] sm:$0xff]
          %268 = vst [vmem:[#allocation2] sm:$0xff] %v266
          %269 = vst [vmem:[#allocation2 + $0x8] sm:$0xff] %v267
        $region44: #{generator_residual_subnet.1} parent=35 // pred_fallthru
          _
        %p270 = scmp.lt.s32.totalorder %s21, 2
        // Predicated region
        $region45: #{generator_residual_subnet.1} parent=35 // pred_check
          %p271 = pneg %p270
        $region46: #{generator_residual_subnet.1} parent=35 // pred_check_branch
          %273 = sbr.rel (%p271) target = $region48
        $region47: #{generator_residual_subnet.1} parent=35 // pred_region
          %v274 = vld [vmem:[#allocation2] sm:$0xff]
          %v275 = vld [vmem:[#allocation2 + $0x8] sm:$0xff]
          %vm278 = vcmask 1040384
          %v279 = vrot.slane %v274, 7
          %v280 = vrot.slane %v275, 7
          %v281 = vsel %vm278, %v279, %v280
          %v284 = vsel %vm278, 0.0, %v279
          %vm285 = vcmask 1046528
          %v286 = vrot.slane %v274, 1
          %v287 = vrot.slane %v275, 1
          %v288 = vsel %vm285, %v286, %v287
          %v291 = vsel %vm285, %v287, 0.0
          %v292 = vpack.c.bf16 %v281, %v284
          %v293 = vpack.c.bf16 %v275, %v274
          %v294 = vpack.c.bf16 %v291, %v288
          %v295 = vld [vmem:[%s251] sm:$0xf]
          %v296 = vld [vmem:[%s251 + $0x4] sm:$0xf]
          %v297 = vld [vmem:[%s251 + $0x8] sm:$0xf]
          %v298 = vld [vmem:[%s251 + $0xc] sm:$0xf]
          %v299 = vld [vmem:[%s251 + $0x10] sm:$0xf]
          %v300 = vld [vmem:[%s251 + $0x14] sm:$0xf]
          %v301 = vld [vmem:[%s251 + $0x18] sm:$0xf]
          %v302 = vld [vmem:[%s251 + $0x1c] sm:$0xf]
          %v303 = vld [vmem:[%s251 + $0x20] sm:$0xf]
          %v304 = vld [vmem:[%s251 + $0x24] sm:$0xf]
          %v305 = vld [vmem:[%s251 + $0x28] sm:$0xf]
          %v306 = vld [vmem:[%s251 + $0x2c] sm:$0xf]
          %v307 = vld [vmem:[%s251 + $0x30] sm:$0xf]
          %v308 = vld [vmem:[%s251 + $0x34] sm:$0xf]
          %v309 = vld [vmem:[%s251 + $0x38] sm:$0xf]
          %v310 = vld [vmem:[%s251 + $0x3c] sm:$0xf]
          %v311 = vld [vmem:[%s251 + $0x40] sm:$0xf]
          %v312 = vld [vmem:[%s251 + $0x44] sm:$0xf]
          %v313 = vld [vmem:[%s251 + $0x48] sm:$0xf]
          %v314 = vld [vmem:[%s251 + $0x4c] sm:$0xf]
          %v315 = vld [vmem:[%s251 + $0x50] sm:$0xf]
          %v316 = vld [vmem:[%s251 + $0x54] sm:$0xf]
          %v317 = vld [vmem:[%s251 + $0x58] sm:$0xf]
          %v318 = vld [vmem:[%s251 + $0x5c] sm:$0xf]
          %v319 = vld [vmem:[%s251 + $0x60] sm:$0xf]
          %v320 = vld [vmem:[%s251 + $0x64] sm:$0xf]
          %v321 = vld [vmem:[%s251 + $0x68] sm:$0xf]
          %v322 = vld [vmem:[%s251 + $0x6c] sm:$0xf]
          %v323 = vld [vmem:[%s251 + $0x70] sm:$0xf]
          %v324 = vld [vmem:[%s251 + $0x74] sm:$0xf]
          %v325 = vld [vmem:[%s251 + $0x78] sm:$0xf]
          %v326 = vld [vmem:[%s251 + $0x7c] sm:$0xf]
          %v327 = vld [vmem:[%s251 + $0x80] sm:$0xf]
          %v328 = vld [vmem:[%s251 + $0x84] sm:$0xf]
          %v329 = vld [vmem:[%s251 + $0x88] sm:$0xf]
          %v330 = vld [vmem:[%s251 + $0x8c] sm:$0xf]
          %v331 = vld [vmem:[%s251 + $0x90] sm:$0xf]
          %v332 = vld [vmem:[%s251 + $0x94] sm:$0xf]
          %v333 = vld [vmem:[%s251 + $0x98] sm:$0xf]
          %v334 = vld [vmem:[%s251 + $0x9c] sm:$0xf]
          %v335 = vld [vmem:[%s251 + $0xa0] sm:$0xf]
          %v336 = vld [vmem:[%s251 + $0xa4] sm:$0xf]
          %v337 = vld [vmem:[%s251 + $0xa8] sm:$0xf]
          %v338 = vld [vmem:[%s251 + $0xac] sm:$0xf]
          %v339 = vld [vmem:[%s251 + $0xb0] sm:$0xf]
          %v340 = vld [vmem:[%s251 + $0xb4] sm:$0xf]
          %v341 = vld [vmem:[%s251 + $0xb8] sm:$0xf]
          %v342 = vld [vmem:[%s251 + $0xbc] sm:$0xf]
          %v343 = vld [vmem:[%s255] sm:$0x1]
          %v345 = vlaneseq
          %v346 = vshrl.u32 %v345, 7
          %v347 = vsub.s32 0, %v346
          %v348 = vrot.slane %v343, %v347
          %v398 = vunpack.c.l.b16 %v295
          %v399 = vunpack.c.l.b16 %v296
          %v400 = vunpack.c.l.b16 %v297
          %v401 = vunpack.c.l.b16 %v298
          %v402 = vunpack.c.l.b16 %v299
          %v403 = vunpack.c.l.b16 %v300
          %v404 = vunpack.c.l.b16 %v301
          %v405 = vunpack.c.l.b16 %v302
          %v406 = vunpack.c.l.b16 %v303
          %v407 = vunpack.c.l.b16 %v304
          %v408 = vunpack.c.l.b16 %v305
          %v409 = vunpack.c.l.b16 %v306
          %v410 = vunpack.c.l.b16 %v307
          %v411 = vunpack.c.l.b16 %v308
          %v412 = vunpack.c.l.b16 %v309
          %v413 = vunpack.c.l.b16 %v310
          %v414 = vunpack.c.l.b16 %v311
          %v415 = vunpack.c.l.b16 %v312
          %v416 = vunpack.c.l.b16 %v313
          %v417 = vunpack.c.l.b16 %v314
          %v418 = vunpack.c.l.b16 %v315
          %v419 = vunpack.c.l.b16 %v316
          %v420 = vunpack.c.l.b16 %v317
          %v421 = vunpack.c.l.b16 %v318
          %v422 = vunpack.c.l.b16 %v319
          %v423 = vunpack.c.l.b16 %v320
          %v424 = vunpack.c.l.b16 %v321
          %v425 = vunpack.c.l.b16 %v322
          %v426 = vunpack.c.l.b16 %v323
          %v427 = vunpack.c.l.b16 %v324
          %v428 = vunpack.c.l.b16 %v325
          %v429 = vunpack.c.l.b16 %v326
          %v430 = vunpack.c.l.b16 %v327
          %v431 = vunpack.c.l.b16 %v328
          %v432 = vunpack.c.l.b16 %v329
          %v433 = vunpack.c.l.b16 %v330
          %v434 = vunpack.c.l.b16 %v331
          %v435 = vunpack.c.l.b16 %v332
          %v436 = vunpack.c.l.b16 %v333
          %v437 = vunpack.c.l.b16 %v334
          %v438 = vunpack.c.l.b16 %v335
          %v439 = vunpack.c.l.b16 %v336
          %v440 = vunpack.c.l.b16 %v337
          %v441 = vunpack.c.l.b16 %v338
          %v442 = vunpack.c.l.b16 %v339
          %v443 = vunpack.c.l.b16 %v340
          %v444 = vunpack.c.l.b16 %v341
          %v445 = vunpack.c.l.b16 %v342
          %v446 = vpack.c.b16 %v399, %v398
          %v447 = vpack.c.b16 %v401, %v400
          %v448 = vpack.c.b16 %v403, %v402
          %v449 = vpack.c.b16 %v405, %v404
          %v450 = vpack.c.b16 %v407, %v406
          %v451 = vpack.c.b16 %v409, %v408
          %v452 = vpack.c.b16 %v411, %v410
          %v453 = vpack.c.b16 %v413, %v412
          %v454 = vpack.c.b16 %v415, %v414
          %v455 = vpack.c.b16 %v417, %v416
          %v456 = vpack.c.b16 %v419, %v418
          %v457 = vpack.c.b16 %v421, %v420
          %v458 = vpack.c.b16 %v423, %v422
          %v459 = vpack.c.b16 %v425, %v424
          %v460 = vpack.c.b16 %v427, %v426
          %v461 = vpack.c.b16 %v429, %v428
          %v462 = vpack.c.b16 %v431, %v430
          %v463 = vpack.c.b16 %v433, %v432
          %v464 = vpack.c.b16 %v435, %v434
          %v465 = vpack.c.b16 %v437, %v436
          %v466 = vpack.c.b16 %v439, %v438
          %v467 = vpack.c.b16 %v441, %v440
          %v468 = vpack.c.b16 %v443, %v442
          %v469 = vpack.c.b16 %v445, %v444
          %494 = vmatprep.subr.bf16.mxu0 0
          %495 = vmatpush1.bf16.msra.mxu0 %v446
          %496 = vmatprep.subr.bf16.mxu0 0
          %497 = vmatpush1.bf16.msra.mxu0 %v447
          %498 = vmatprep.subr.bf16.mxu0 0
          %499 = vmatpush1.bf16.msra.mxu0 %v448
          %500 = vmatprep.subr.bf16.mxu0 0
          %501 = vmatpush1.bf16.msra.mxu0 %v449
          %502 = vmatprep.subr.bf16.mxu0 0
          %503 = vmatpush1.bf16.msra.mxu0 %v450
          %504 = vmatprep.subr.bf16.mxu0 0
          %505 = vmatpush1.bf16.msra.mxu0 %v451
          %506 = vmatprep.subr.bf16.mxu0 0
          %507 = vmatpush1.bf16.msra.mxu0 %v452
          %508 = vmatprep.subr.bf16.mxu0 0
          %509 = vmatpush1.bf16.msra.mxu0 %v453
          %510 = vmatprep.subr.bf16.mxu0 0
          %511 = vmatpush1.bf16.msra.mxu0 %v454
          %512 = vmatprep.subr.bf16.mxu0 0
          %513 = vmatpush1.bf16.msra.mxu0 %v455
          %514 = vmatprep.subr.bf16.mxu0 0
          %515 = vmatpush1.bf16.msra.mxu0 %v456
          %516 = vmatprep.subr.bf16.mxu0 0
          %517 = vmatpush1.bf16.msra.mxu0 %v457
          %518 = vmatprep.subr.bf16.mxu0 0
          %519 = vmatpush1.bf16.msra.mxu0 %v458
          %520 = vmatprep.subr.bf16.mxu0 0
          %521 = vmatpush1.bf16.msra.mxu0 %v459
          %522 = vmatprep.subr.bf16.mxu0 0
          %523 = vmatpush1.bf16.msra.mxu0 %v460
          %524 = vmatprep.subr.bf16.mxu0 0
          %525 = vmatpush1.bf16.msra.mxu0 %v461
          %526 = vmatprep.mubr.bf16.mxu0 %v293
          %527 = vmatmul.mubr.bf16.gmra.mrb[0].mxu0 %v292
          %v528 = vpop.f32.mrb[0].mxu0
          %v529 = vadd.f32 %v348, %v528
          %v530 = vpop.f32.mrb[0].mxu0
          %v531 = vpop.f32.mrb[0].mxu0
          %v532 = vadd.f32 %v348, %v531
          %v533 = vpop.f32.mrb[0].mxu0
          %534 = vdwg.mxu0
          %535 = vmatprep.subr.bf16.mxu0 0
          %536 = vmatpush1.bf16.msra.mxu0 %v462
          %537 = vmatprep.subr.bf16.mxu0 0
          %538 = vmatpush1.bf16.msra.mxu0 %v463
          %539 = vmatprep.subr.bf16.mxu0 0
          %540 = vmatpush1.bf16.msra.mxu0 %v464
          %541 = vmatprep.subr.bf16.mxu0 0
          %542 = vmatpush1.bf16.msra.mxu0 %v465
          %543 = vmatprep.subr.bf16.mxu0 0
          %544 = vmatpush1.bf16.msra.mxu0 %v466
          %545 = vmatprep.subr.bf16.mxu0 0
          %546 = vmatpush1.bf16.msra.mxu0 %v467
          %547 = vmatprep.subr.bf16.mxu0 0
          %548 = vmatpush1.bf16.msra.mxu0 %v468
          %549 = vmatprep.subr.bf16.mxu0 0
          %550 = vmatpush1.bf16.msra.mxu0 %v469
          %551 = vmatprep.subr.bf16.mxu0 0
          %552 = vmatpush1.bf16.msra.mxu0 0
          %553 = vmatprep.subr.bf16.mxu0 0
          %554 = vmatpush1.bf16.msra.mxu0 0
          %555 = vmatprep.subr.bf16.mxu0 0
          %556 = vmatpush1.bf16.msra.mxu0 0
          %557 = vmatprep.subr.bf16.mxu0 0
          %558 = vmatpush1.bf16.msra.mxu0 0
          %559 = vmatprep.subr.bf16.mxu0 0
          %560 = vmatpush1.bf16.msra.mxu0 0
          %561 = vmatprep.subr.bf16.mxu0 0
          %562 = vmatpush1.bf16.msra.mxu0 0
          %563 = vmatprep.subr.bf16.mxu0 0
          %564 = vmatpush1.bf16.msra.mxu0 0
          %565 = vmatprep.subr.bf16.mxu0 0
          %566 = vmatpush1.bf16.msra.mxu0 0
          %567 = vmatprep.mubr.bf16.mxu0 0
          %568 = vmatmul.mubr.bf16.gmra.mrb[0].mxu0 %v294
          %v569 = vpop.f32.mrb[0].mxu0
          %v570 = vadd.f32 %v529, %v569
          %v571 = vpop.f32.mrb[0].mxu0
          %v572 = vpop.f32.mrb[0].mxu0
          %v573 = vadd.f32 %v532, %v572
          %v574 = vpop.f32.mrb[0].mxu0
          %575 = vdwg.mxu0
          %s576 = sld [smem:[#allocation3 + %s21]]
          %vm577 = vcmp.ge.f32.partialorder %v570, 0.0
          %vm578 = vcmp.ge.f32.partialorder %v573, 0.0
          %v579 = vstv %s576
          %v580 = vmul.f32 %v579, %v570
          %v581 = vmul.f32 %v579, %v573
          %v582 = vsel %vm577, %v570, %v580
          %v583 = vsel %vm578, %v573, %v581
          %v586 = vrot.slane %v582, 7
          %v587 = vrot.slane %v583, 7
          %v588 = vsel %vm278, %v586, %v587
          %v591 = vsel %vm278, 0.0, %v586
          %v592 = vrot.slane %v582, 1
          %v593 = vrot.slane %v583, 1
          %v594 = vsel %vm285, %v592, %v593
          %v597 = vsel %vm285, %v593, 0.0
          %v598 = vpack.c.bf16 %v588, %v591
          %v599 = vpack.c.bf16 %v583, %v582
          %v600 = vpack.c.bf16 %v597, %v594
          %s601 = scalar_lea.vmem %s251, 192
          %v602 = vld [vmem:[%s601] sm:$0xf]
          %v603 = vld [vmem:[%s601 + $0x4] sm:$0xf]
          %v604 = vld [vmem:[%s601 + $0x8] sm:$0xf]
          %v605 = vld [vmem:[%s601 + $0xc] sm:$0xf]
          %v606 = vld [vmem:[%s601 + $0x10] sm:$0xf]
          %v607 = vld [vmem:[%s601 + $0x14] sm:$0xf]
          %v608 = vld [vmem:[%s601 + $0x18] sm:$0xf]
          %v609 = vld [vmem:[%s601 + $0x1c] sm:$0xf]
          %v610 = vld [vmem:[%s601 + $0x20] sm:$0xf]
          %v611 = vld [vmem:[%s601 + $0x24] sm:$0xf]
          %v612 = vld [vmem:[%s601 + $0x28] sm:$0xf]
          %v613 = vld [vmem:[%s601 + $0x2c] sm:$0xf]
          %v614 = vld [vmem:[%s601 + $0x30] sm:$0xf]
          %v615 = vld [vmem:[%s601 + $0x34] sm:$0xf]
          %v616 = vld [vmem:[%s601 + $0x38] sm:$0xf]
          %v617 = vld [vmem:[%s601 + $0x3c] sm:$0xf]
          %v618 = vld [vmem:[%s601 + $0x40] sm:$0xf]
          %v619 = vld [vmem:[%s601 + $0x44] sm:$0xf]
          %v620 = vld [vmem:[%s601 + $0x48] sm:$0xf]
          %v621 = vld [vmem:[%s601 + $0x4c] sm:$0xf]
          %v622 = vld [vmem:[%s601 + $0x50] sm:$0xf]
          %v623 = vld [vmem:[%s601 + $0x54] sm:$0xf]
          %v624 = vld [vmem:[%s601 + $0x58] sm:$0xf]
          %v625 = vld [vmem:[%s601 + $0x5c] sm:$0xf]
          %v626 = vld [vmem:[%s601 + $0x60] sm:$0xf]
          %v627 = vld [vmem:[%s601 + $0x64] sm:$0xf]
          %v628 = vld [vmem:[%s601 + $0x68] sm:$0xf]
          %v629 = vld [vmem:[%s601 + $0x6c] sm:$0xf]
          %v630 = vld [vmem:[%s601 + $0x70] sm:$0xf]
          %v631 = vld [vmem:[%s601 + $0x74] sm:$0xf]
          %v632 = vld [vmem:[%s601 + $0x78] sm:$0xf]
          %v633 = vld [vmem:[%s601 + $0x7c] sm:$0xf]
          %v634 = vld [vmem:[%s601 + $0x80] sm:$0xf]
          %v635 = vld [vmem:[%s601 + $0x84] sm:$0xf]
          %v636 = vld [vmem:[%s601 + $0x88] sm:$0xf]
          %v637 = vld [vmem:[%s601 + $0x8c] sm:$0xf]
          %v638 = vld [vmem:[%s601 + $0x90] sm:$0xf]
          %v639 = vld [vmem:[%s601 + $0x94] sm:$0xf]
          %v640 = vld [vmem:[%s601 + $0x98] sm:$0xf]
          %v641 = vld [vmem:[%s601 + $0x9c] sm:$0xf]
          %v642 = vld [vmem:[%s601 + $0xa0] sm:$0xf]
          %v643 = vld [vmem:[%s601 + $0xa4] sm:$0xf]
          %v644 = vld [vmem:[%s601 + $0xa8] sm:$0xf]
          %v645 = vld [vmem:[%s601 + $0xac] sm:$0xf]
          %v646 = vld [vmem:[%s601 + $0xb0] sm:$0xf]
          %v647 = vld [vmem:[%s601 + $0xb4] sm:$0xf]
          %v648 = vld [vmem:[%s601 + $0xb8] sm:$0xf]
          %v649 = vld [vmem:[%s601 + $0xbc] sm:$0xf]
          %s650 = scalar_lea.vmem %s255, 1
          %v651 = vld [vmem:[%s650] sm:$0x1]
          %v653 = vlaneseq
          %v654 = vshrl.u32 %v653, 7
          %v655 = vsub.s32 0, %v654
          %v656 = vrot.slane %v651, %v655
          %v706 = vunpack.c.l.b16 %v602
          %v707 = vunpack.c.l.b16 %v603
          %v708 = vunpack.c.l.b16 %v604
          %v709 = vunpack.c.l.b16 %v605
          %v710 = vunpack.c.l.b16 %v606
          %v711 = vunpack.c.l.b16 %v607
          %v712 = vunpack.c.l.b16 %v608
          %v713 = vunpack.c.l.b16 %v609
          %v714 = vunpack.c.l.b16 %v610
          %v715 = vunpack.c.l.b16 %v611
          %v716 = vunpack.c.l.b16 %v612
          %v717 = vunpack.c.l.b16 %v613
          %v718 = vunpack.c.l.b16 %v614
          %v719 = vunpack.c.l.b16 %v615
          %v720 = vunpack.c.l.b16 %v616
          %v721 = vunpack.c.l.b16 %v617
          %v722 = vunpack.c.l.b16 %v618
          %v723 = vunpack.c.l.b16 %v619
          %v724 = vunpack.c.l.b16 %v620
          %v725 = vunpack.c.l.b16 %v621
          %v726 = vunpack.c.l.b16 %v622
          %v727 = vunpack.c.l.b16 %v623
          %v728 = vunpack.c.l.b16 %v624
          %v729 = vunpack.c.l.b16 %v625
          %v730 = vunpack.c.l.b16 %v626
          %v731 = vunpack.c.l.b16 %v627
          %v732 = vunpack.c.l.b16 %v628
          %v733 = vunpack.c.l.b16 %v629
          %v734 = vunpack.c.l.b16 %v630
          %v735 = vunpack.c.l.b16 %v631
          %v736 = vunpack.c.l.b16 %v632
          %v737 = vunpack.c.l.b16 %v633
          %v738 = vunpack.c.l.b16 %v634
          %v739 = vunpack.c.l.b16 %v635
          %v740 = vunpack.c.l.b16 %v636
          %v741 = vunpack.c.l.b16 %v637
          %v742 = vunpack.c.l.b16 %v638
          %v743 = vunpack.c.l.b16 %v639
          %v744 = vunpack.c.l.b16 %v640
          %v745 = vunpack.c.l.b16 %v641
          %v746 = vunpack.c.l.b16 %v642
          %v747 = vunpack.c.l.b16 %v643
          %v748 = vunpack.c.l.b16 %v644
          %v749 = vunpack.c.l.b16 %v645
          %v750 = vunpack.c.l.b16 %v646
          %v751 = vunpack.c.l.b16 %v647
          %v752 = vunpack.c.l.b16 %v648
          %v753 = vunpack.c.l.b16 %v649
          %v754 = vpack.c.b16 %v707, %v706
          %v755 = vpack.c.b16 %v709, %v708
          %v756 = vpack.c.b16 %v711, %v710
          %v757 = vpack.c.b16 %v713, %v712
          %v758 = vpack.c.b16 %v715, %v714
          %v759 = vpack.c.b16 %v717, %v716
          %v760 = vpack.c.b16 %v719, %v718
          %v761 = vpack.c.b16 %v721, %v720
          %v762 = vpack.c.b16 %v723, %v722
          %v763 = vpack.c.b16 %v725, %v724
          %v764 = vpack.c.b16 %v727, %v726
          %v765 = vpack.c.b16 %v729, %v728
          %v766 = vpack.c.b16 %v731, %v730
          %v767 = vpack.c.b16 %v733, %v732
          %v768 = vpack.c.b16 %v735, %v734
          %v769 = vpack.c.b16 %v737, %v736
          %v770 = vpack.c.b16 %v739, %v738
          %v771 = vpack.c.b16 %v741, %v740
          %v772 = vpack.c.b16 %v743, %v742
          %v773 = vpack.c.b16 %v745, %v744
          %v774 = vpack.c.b16 %v747, %v746
          %v775 = vpack.c.b16 %v749, %v748
          %v776 = vpack.c.b16 %v751, %v750
          %v777 = vpack.c.b16 %v753, %v752
          %802 = vmatprep.subr.bf16.mxu0 0
          %803 = vmatpush1.bf16.msra.mxu0 %v754
          %804 = vmatprep.subr.bf16.mxu0 0
          %805 = vmatpush1.bf16.msra.mxu0 %v755
          %806 = vmatprep.subr.bf16.mxu0 0
          %807 = vmatpush1.bf16.msra.mxu0 %v756
          %808 = vmatprep.subr.bf16.mxu0 0
          %809 = vmatpush1.bf16.msra.mxu0 %v757
          %810 = vmatprep.subr.bf16.mxu0 0
          %811 = vmatpush1.bf16.msra.mxu0 %v758
          %812 = vmatprep.subr.bf16.mxu0 0
          %813 = vmatpush1.bf16.msra.mxu0 %v759
          %814 = vmatprep.subr.bf16.mxu0 0
          %815 = vmatpush1.bf16.msra.mxu0 %v760
          %816 = vmatprep.subr.bf16.mxu0 0
          %817 = vmatpush1.bf16.msra.mxu0 %v761
          %818 = vmatprep.subr.bf16.mxu0 0
          %819 = vmatpush1.bf16.msra.mxu0 %v762
          %820 = vmatprep.subr.bf16.mxu0 0
          %821 = vmatpush1.bf16.msra.mxu0 %v763
          %822 = vmatprep.subr.bf16.mxu0 0
          %823 = vmatpush1.bf16.msra.mxu0 %v764
          %824 = vmatprep.subr.bf16.mxu0 0
          %825 = vmatpush1.bf16.msra.mxu0 %v765
          %826 = vmatprep.subr.bf16.mxu0 0
          %827 = vmatpush1.bf16.msra.mxu0 %v766
          %828 = vmatprep.subr.bf16.mxu0 0
          %829 = vmatpush1.bf16.msra.mxu0 %v767
          %830 = vmatprep.subr.bf16.mxu0 0
          %831 = vmatpush1.bf16.msra.mxu0 %v768
          %832 = vmatprep.subr.bf16.mxu0 0
          %833 = vmatpush1.bf16.msra.mxu0 %v769
          %834 = vmatprep.mubr.bf16.mxu0 %v599
          %835 = vmatmul.mubr.bf16.gmra.mrb[0].mxu0 %v598
          %v836 = vpop.f32.mrb[0].mxu0
          %v837 = vadd.f32 %v656, %v836
          %v838 = vpop.f32.mrb[0].mxu0
          %v839 = vpop.f32.mrb[0].mxu0
          %v840 = vadd.f32 %v656, %v839
          %v841 = vpop.f32.mrb[0].mxu0
          %842 = vdwg.mxu0
          %843 = vmatprep.subr.bf16.mxu0 0
          %844 = vmatpush1.bf16.msra.mxu0 %v770
          %845 = vmatprep.subr.bf16.mxu0 0
          %846 = vmatpush1.bf16.msra.mxu0 %v771
          %847 = vmatprep.subr.bf16.mxu0 0
          %848 = vmatpush1.bf16.msra.mxu0 %v772
          %849 = vmatprep.subr.bf16.mxu0 0
          %850 = vmatpush1.bf16.msra.mxu0 %v773
          %851 = vmatprep.subr.bf16.mxu0 0
          %852 = vmatpush1.bf16.msra.mxu0 %v774
          %853 = vmatprep.subr.bf16.mxu0 0
          %854 = vmatpush1.bf16.msra.mxu0 %v775
          %855 = vmatprep.subr.bf16.mxu0 0
          %856 = vmatpush1.bf16.msra.mxu0 %v776
          %857 = vmatprep.subr.bf16.mxu0 0
          %858 = vmatpush1.bf16.msra.mxu0 %v777
          %859 = vmatprep.subr.bf16.mxu0 0
          %860 = vmatpush1.bf16.msra.mxu0 0
          %861 = vmatprep.subr.bf16.mxu0 0
          %862 = vmatpush1.bf16.msra.mxu0 0
          %863 = vmatprep.subr.bf16.mxu0 0
          %864 = vmatpush1.bf16.msra.mxu0 0
          %865 = vmatprep.subr.bf16.mxu0 0
          %866 = vmatpush1.bf16.msra.mxu0 0
          %867 = vmatprep.subr.bf16.mxu0 0
          %868 = vmatpush1.bf16.msra.mxu0 0
          %869 = vmatprep.subr.bf16.mxu0 0
          %870 = vmatpush1.bf16.msra.mxu0 0
          %871 = vmatprep.subr.bf16.mxu0 0
          %872 = vmatpush1.bf16.msra.mxu0 0
          %873 = vmatprep.subr.bf16.mxu0 0
          %874 = vmatpush1.bf16.msra.mxu0 0
          %875 = vmatprep.mubr.bf16.mxu0 0
          %876 = vmatmul.mubr.bf16.gmra.mrb[0].mxu0 %v600
          %v877 = vpop.f32.mrb[0].mxu0
          %v878 = vadd.f32 %v837, %v877
          %v879 = vpop.f32.mrb[0].mxu0
          %v880 = vpop.f32.mrb[0].mxu0
          %v881 = vadd.f32 %v840, %v880
          %v882 = vpop.f32.mrb[0].mxu0
          %883 = vdwg.mxu0
          %v884 = vadd.f32 %v274, %v878
          %v885 = vadd.f32 %v275, %v881
          %886 = vst [vmem:[#allocation2] sm:$0xff] %v884
          %887 = vst [vmem:[#allocation2 + $0x8] sm:$0xff] %v885
        $region48: #{generator_residual_subnet.1} parent=35 // pred_fallthru
          _
        %p888 = scmp.eq.s32.totalorder %s21, 2
        // Predicated region
        $region49: #{generator_residual_subnet.1} parent=35 // pred_check
          %p889 = pneg %p888
        $region50: #{generator_residual_subnet.1} parent=35 // pred_check_branch
          %891 = sbr.rel (%p889) target = $region52
        $region51: #{generator_residual_subnet.1} parent=35 // pred_region
          %v892 = vld [vmem:[#allocation2] sm:$0xff]
          %v893 = vld [vmem:[#allocation2 + $0x8] sm:$0xff]
          %vm896 = vcmask 1040384
          %v897 = vrot.slane %v892, 7
          %v898 = vrot.slane %v893, 7
          %v899 = vsel %vm896, %v897, %v898
          %v902 = vsel %vm896, 0.0, %v897
          %vm903 = vcmask 1046528
          %v904 = vrot.slane %v892, 1
          %v905 = vrot.slane %v893, 1
          %v906 = vsel %vm903, %v904, %v905
          %v909 = vsel %vm903, %v905, 0.0
          %v910 = vpack.c.bf16 %v899, %v902
          %v911 = vpack.c.bf16 %v893, %v892
          %v912 = vpack.c.bf16 %v909, %v906
          %v913 = vld [vmem:[%s251] sm:$0xf]
          %v914 = vld [vmem:[%s251 + $0x4] sm:$0xf]
          %v915 = vld [vmem:[%s251 + $0x8] sm:$0xf]
          %v916 = vld [vmem:[%s251 + $0xc] sm:$0xf]
          %v917 = vld [vmem:[%s251 + $0x10] sm:$0xf]
          %v918 = vld [vmem:[%s251 + $0x14] sm:$0xf]
          %v919 = vld [vmem:[%s251 + $0x18] sm:$0xf]
          %v920 = vld [vmem:[%s251 + $0x1c] sm:$0xf]
          %v921 = vld [vmem:[%s251 + $0x20] sm:$0xf]
          %v922 = vld [vmem:[%s251 + $0x24] sm:$0xf]
          %v923 = vld [vmem:[%s251 + $0x28] sm:$0xf]
          %v924 = vld [vmem:[%s251 + $0x2c] sm:$0xf]
          %v925 = vld [vmem:[%s251 + $0x30] sm:$0xf]
          %v926 = vld [vmem:[%s251 + $0x34] sm:$0xf]
          %v927 = vld [vmem:[%s251 + $0x38] sm:$0xf]
          %v928 = vld [vmem:[%s251 + $0x3c] sm:$0xf]
          %v929 = vld [vmem:[%s251 + $0x40] sm:$0xf]
          %v930 = vld [vmem:[%s251 + $0x44] sm:$0xf]
          %v931 = vld [vmem:[%s251 + $0x48] sm:$0xf]
          %v932 = vld [vmem:[%s251 + $0x4c] sm:$0xf]
          %v933 = vld [vmem:[%s251 + $0x50] sm:$0xf]
          %v934 = vld [vmem:[%s251 + $0x54] sm:$0xf]
          %v935 = vld [vmem:[%s251 + $0x58] sm:$0xf]
          %v936 = vld [vmem:[%s251 + $0x5c] sm:$0xf]
          %v937 = vld [vmem:[%s251 + $0x60] sm:$0xf]
          %v938 = vld [vmem:[%s251 + $0x64] sm:$0xf]
          %v939 = vld [vmem:[%s251 + $0x68] sm:$0xf]
          %v940 = vld [vmem:[%s251 + $0x6c] sm:$0xf]
          %v941 = vld [vmem:[%s251 + $0x70] sm:$0xf]
          %v942 = vld [vmem:[%s251 + $0x74] sm:$0xf]
          %v943 = vld [vmem:[%s251 + $0x78] sm:$0xf]
          %v944 = vld [vmem:[%s251 + $0x7c] sm:$0xf]
          %v945 = vld [vmem:[%s251 + $0x80] sm:$0xf]
          %v946 = vld [vmem:[%s251 + $0x84] sm:$0xf]
          %v947 = vld [vmem:[%s251 + $0x88] sm:$0xf]
          %v948 = vld [vmem:[%s251 + $0x8c] sm:$0xf]
          %v949 = vld [vmem:[%s251 + $0x90] sm:$0xf]
          %v950 = vld [vmem:[%s251 + $0x94] sm:$0xf]
          %v951 = vld [vmem:[%s251 + $0x98] sm:$0xf]
          %v952 = vld [vmem:[%s251 + $0x9c] sm:$0xf]
          %v953 = vld [vmem:[%s251 + $0xa0] sm:$0xf]
          %v954 = vld [vmem:[%s251 + $0xa4] sm:$0xf]
          %v955 = vld [vmem:[%s251 + $0xa8] sm:$0xf]
          %v956 = vld [vmem:[%s251 + $0xac] sm:$0xf]
          %v957 = vld [vmem:[%s251 + $0xb0] sm:$0xf]
          %v958 = vld [vmem:[%s251 + $0xb4] sm:$0xf]
          %v959 = vld [vmem:[%s251 + $0xb8] sm:$0xf]
          %v960 = vld [vmem:[%s251 + $0xbc] sm:$0xf]
          %v961 = vld [vmem:[%s255] sm:$0x1]
          %v963 = vlaneseq
          %v964 = vshrl.u32 %v963, 7
          %v965 = vsub.s32 0, %v964
          %v966 = vrot.slane %v961, %v965
          %v1016 = vunpack.c.l.b16 %v913
          %v1017 = vunpack.c.l.b16 %v914
          %v1018 = vunpack.c.l.b16 %v915
          %v1019 = vunpack.c.l.b16 %v916
          %v1020 = vunpack.c.l.b16 %v917
          %v1021 = vunpack.c.l.b16 %v918
          %v1022 = vunpack.c.l.b16 %v919
          %v1023 = vunpack.c.l.b16 %v920
          %v1024 = vunpack.c.l.b16 %v921
          %v1025 = vunpack.c.l.b16 %v922
          %v1026 = vunpack.c.l.b16 %v923
          %v1027 = vunpack.c.l.b16 %v924
          %v1028 = vunpack.c.l.b16 %v925
          %v1029 = vunpack.c.l.b16 %v926
          %v1030 = vunpack.c.l.b16 %v927
          %v1031 = vunpack.c.l.b16 %v928
          %v1032 = vunpack.c.l.b16 %v929
          %v1033 = vunpack.c.l.b16 %v930
          %v1034 = vunpack.c.l.b16 %v931
          %v1035 = vunpack.c.l.b16 %v932
          %v1036 = vunpack.c.l.b16 %v933
          %v1037 = vunpack.c.l.b16 %v934
          %v1038 = vunpack.c.l.b16 %v935
          %v1039 = vunpack.c.l.b16 %v936
          %v1040 = vunpack.c.l.b16 %v937
          %v1041 = vunpack.c.l.b16 %v938
          %v1042 = vunpack.c.l.b16 %v939
          %v1043 = vunpack.c.l.b16 %v940
          %v1044 = vunpack.c.l.b16 %v941
          %v1045 = vunpack.c.l.b16 %v942
          %v1046 = vunpack.c.l.b16 %v943
          %v1047 = vunpack.c.l.b16 %v944
          %v1048 = vunpack.c.l.b16 %v945
          %v1049 = vunpack.c.l.b16 %v946
          %v1050 = vunpack.c.l.b16 %v947
          %v1051 = vunpack.c.l.b16 %v948
          %v1052 = vunpack.c.l.b16 %v949
          %v1053 = vunpack.c.l.b16 %v950
          %v1054 = vunpack.c.l.b16 %v951
          %v1055 = vunpack.c.l.b16 %v952
          %v1056 = vunpack.c.l.b16 %v953
          %v1057 = vunpack.c.l.b16 %v954
          %v1058 = vunpack.c.l.b16 %v955
          %v1059 = vunpack.c.l.b16 %v956
          %v1060 = vunpack.c.l.b16 %v957
          %v1061 = vunpack.c.l.b16 %v958
          %v1062 = vunpack.c.l.b16 %v959
          %v1063 = vunpack.c.l.b16 %v960
          %v1064 = vpack.c.b16 %v1017, %v1016
          %v1065 = vpack.c.b16 %v1019, %v1018
          %v1066 = vpack.c.b16 %v1021, %v1020
          %v1067 = vpack.c.b16 %v1023, %v1022
          %v1068 = vpack.c.b16 %v1025, %v1024
          %v1069 = vpack.c.b16 %v1027, %v1026
          %v1070 = vpack.c.b16 %v1029, %v1028
          %v1071 = vpack.c.b16 %v1031, %v1030
          %v1072 = vpack.c.b16 %v1033, %v1032
          %v1073 = vpack.c.b16 %v1035, %v1034
          %v1074 = vpack.c.b16 %v1037, %v1036
          %v1075 = vpack.c.b16 %v1039, %v1038
          %v1076 = vpack.c.b16 %v1041, %v1040
          %v1077 = vpack.c.b16 %v1043, %v1042
          %v1078 = vpack.c.b16 %v1045, %v1044
          %v1079 = vpack.c.b16 %v1047, %v1046
          %v1080 = vpack.c.b16 %v1049, %v1048
          %v1081 = vpack.c.b16 %v1051, %v1050
          %v1082 = vpack.c.b16 %v1053, %v1052
          %v1083 = vpack.c.b16 %v1055, %v1054
          %v1084 = vpack.c.b16 %v1057, %v1056
          %v1085 = vpack.c.b16 %v1059, %v1058
          %v1086 = vpack.c.b16 %v1061, %v1060
          %v1087 = vpack.c.b16 %v1063, %v1062
          %1112 = vmatprep.subr.bf16.mxu0 0
          %1113 = vmatpush1.bf16.msra.mxu0 %v1064
          %1114 = vmatprep.subr.bf16.mxu0 0
          %1115 = vmatpush1.bf16.msra.mxu0 %v1065
          %1116 = vmatprep.subr.bf16.mxu0 0
          %1117 = vmatpush1.bf16.msra.mxu0 %v1066
          %1118 = vmatprep.subr.bf16.mxu0 0
          %1119 = vmatpush1.bf16.msra.mxu0 %v1067
          %1120 = vmatprep.subr.bf16.mxu0 0
          %1121 = vmatpush1.bf16.msra.mxu0 %v1068
          %1122 = vmatprep.subr.bf16.mxu0 0
          %1123 = vmatpush1.bf16.msra.mxu0 %v1069
          %1124 = vmatprep.subr.bf16.mxu0 0
          %1125 = vmatpush1.bf16.msra.mxu0 %v1070
          %1126 = vmatprep.subr.bf16.mxu0 0
          %1127 = vmatpush1.bf16.msra.mxu0 %v1071
          %1128 = vmatprep.subr.bf16.mxu0 0
          %1129 = vmatpush1.bf16.msra.mxu0 %v1072
          %1130 = vmatprep.subr.bf16.mxu0 0
          %1131 = vmatpush1.bf16.msra.mxu0 %v1073
          %1132 = vmatprep.subr.bf16.mxu0 0
          %1133 = vmatpush1.bf16.msra.mxu0 %v1074
          %1134 = vmatprep.subr.bf16.mxu0 0
          %1135 = vmatpush1.bf16.msra.mxu0 %v1075
          %1136 = vmatprep.subr.bf16.mxu0 0
          %1137 = vmatpush1.bf16.msra.mxu0 %v1076
          %1138 = vmatprep.subr.bf16.mxu0 0
          %1139 = vmatpush1.bf16.msra.mxu0 %v1077
          %1140 = vmatprep.subr.bf16.mxu0 0
          %1141 = vmatpush1.bf16.msra.mxu0 %v1078
          %1142 = vmatprep.subr.bf16.mxu0 0
          %1143 = vmatpush1.bf16.msra.mxu0 %v1079
          %1144 = vmatprep.mubr.bf16.mxu0 %v911
          %1145 = vmatmul.mubr.bf16.gmra.mrb[0].mxu0 %v910
          %v1146 = vpop.f32.mrb[0].mxu0
          %v1147 = vadd.f32 %v966, %v1146
          %v1148 = vpop.f32.mrb[0].mxu0
          %v1149 = vpop.f32.mrb[0].mxu0
          %v1150 = vadd.f32 %v966, %v1149
          %v1151 = vpop.f32.mrb[0].mxu0
          %1152 = vdwg.mxu0
          %1153 = vmatprep.subr.bf16.mxu0 0
          %1154 = vmatpush1.bf16.msra.mxu0 %v1080
          %1155 = vmatprep.subr.bf16.mxu0 0
          %1156 = vmatpush1.bf16.msra.mxu0 %v1081
          %1157 = vmatprep.subr.bf16.mxu0 0
          %1158 = vmatpush1.bf16.msra.mxu0 %v1082
          %1159 = vmatprep.subr.bf16.mxu0 0
          %1160 = vmatpush1.bf16.msra.mxu0 %v1083
          %1161 = vmatprep.subr.bf16.mxu0 0
          %1162 = vmatpush1.bf16.msra.mxu0 %v1084
          %1163 = vmatprep.subr.bf16.mxu0 0
          %1164 = vmatpush1.bf16.msra.mxu0 %v1085
          %1165 = vmatprep.subr.bf16.mxu0 0
          %1166 = vmatpush1.bf16.msra.mxu0 %v1086
          %1167 = vmatprep.subr.bf16.mxu0 0
          %1168 = vmatpush1.bf16.msra.mxu0 %v1087
          %1169 = vmatprep.subr.bf16.mxu0 0
          %1170 = vmatpush1.bf16.msra.mxu0 0
          %1171 = vmatprep.subr.bf16.mxu0 0
          %1172 = vmatpush1.bf16.msra.mxu0 0
          %1173 = vmatprep.subr.bf16.mxu0 0
          %1174 = vmatpush1.bf16.msra.mxu0 0
          %1175 = vmatprep.subr.bf16.mxu0 0
          %1176 = vmatpush1.bf16.msra.mxu0 0
          %1177 = vmatprep.subr.bf16.mxu0 0
          %1178 = vmatpush1.bf16.msra.mxu0 0
          %1179 = vmatprep.subr.bf16.mxu0 0
          %1180 = vmatpush1.bf16.msra.mxu0 0
          %1181 = vmatprep.subr.bf16.mxu0 0
          %1182 = vmatpush1.bf16.msra.mxu0 0
          %1183 = vmatprep.subr.bf16.mxu0 0
          %1184 = vmatpush1.bf16.msra.mxu0 0
          %1185 = vmatprep.mubr.bf16.mxu0 0
          %1186 = vmatmul.mubr.bf16.gmra.mrb[0].mxu0 %v912
          %v1187 = vpop.f32.mrb[0].mxu0
          %v1188 = vadd.f32 %v1147, %v1187
          %v1189 = vpop.f32.mrb[0].mxu0
          %v1190 = vpop.f32.mrb[0].mxu0
          %v1191 = vadd.f32 %v1150, %v1190
          %v1192 = vpop.f32.mrb[0].mxu0
          %1193 = vdwg.mxu0
          %v1194 = vld [vmem:[%s246] sm:$0xff]
          %v1195 = vld [vmem:[%s246 + $0x8] sm:$0xff]
          %v1196 = vadd.f32 %v1194, %v1188
          %v1197 = vadd.f32 %v1195, %v1191
          %1198 = vst [vmem:[%s260] sm:$0xff] %v1196
          %1199 = vst [vmem:[%s260 + $0x8] sm:$0xff] %v1197
        $region52: #{generator_residual_subnet.1} parent=35 // pred_fallthru
          _
        %p1200 = scmp.lt.s32.totalorder %s20, 1
        %s1201 = scalar_select %p1200, %s20, 1
        %s1202 = smul.addr %s1201, 2
        %s1203 = smul.addr %s1202, 8
        %s1204 = scalar_lea.vmem %s4, %s1203
        // Predicated region
        $region53: #{generator_residual_subnet.1} parent=35 // pred_check
          %p1205 = pneg %p145
        $region54: #{generator_residual_subnet.1} parent=35 // pred_check_branch
          %1207 = sbr.rel (%p1205) target = $region56
        $region55: #{generator_residual_subnet.1} parent=35 // pred_region
          _
        $region56: #{generator_residual_subnet.1} parent=35 // pred_fallthru
          _
      $region36: #{generator_residual_subnet.1} parent=5 // pred_fallthru
        _
      %p1208 = scmp.le.s32.totalorder 2, %s11
      // Predicated region
      $region57: #{generator_residual_subnet.1} parent=5 // pred_check
        %p1209 = pneg %p1208
      $region58: #{generator_residual_subnet.1} parent=5 // pred_check_branch
        %1211 = sbr.rel (%p1209) target = $region60
      $region59: #{generator_residual_subnet.1} parent=5 // pred_region
        %s1212 = ssub.s32 %s11, 2
        // Predicated region
        $region61: #{generator_residual_subnet.1} parent=59 // pred_check
          %p1213 = pneg %p151
        $region62: #{generator_residual_subnet.1} parent=59 // pred_check_branch
          %1215 = sbr.rel (%p1213) target = $region64
        $region63: #{generator_residual_subnet.1} parent=59 // pred_region
          %p1216 = scmp.lt.s32.totalorder %s22, 1
          %s1217 = scalar_select %p1216, %s22, 1
          %s1218 = smul.addr %s1217, 2
          %s1219 = smul.addr %s1218, 8
          %s1220 = scalar_lea.vmem %s4, %s1219
        $region64: #{generator_residual_subnet.1} parent=59 // pred_fallthru
          _
      $region60: #{generator_residual_subnet.1} parent=5 // pred_fallthru
        _
    $region6: #{generator_residual_subnet.1} parent=1 // loop_footer
      %s15 = sadd.s32 1, %s11
    $region7: #{generator_residual_subnet.1} parent=1 // loop_footer_branch
      %10 = sbr.rel target = $region3
    $region8: #{generator_residual_subnet.1} parent=1 // loop_exit
      _
    %1221 = vsyncpa [#allocation4], 1
    %s1222 = scalar_lea.sflag [#allocation4], 1
    %1223 = vsyncpa %s1222, 1

</llo_original>
